<compile_context>
chip_gen: v6e
topology: v6e:2x2x1
jax: 0.10.0
libtpu: 0.0.40
codegen_flags: <defaults>
</compile_context>

<pallas_src>
import functools

import jax
import jax.numpy as jnp
from jax.experimental import pallas as pl
from jax.experimental.pallas import tpu as pltpu

_EPS = 1e-5


def _round_up(x, m):
    return (x + m - 1) // m * m


# ---------------------------------------------------------------------------
# Fused kernel: all hidden layers + final linear in one body.
# ---------------------------------------------------------------------------
def _fused_mlp_kernel(slopes_ref, x_ref, *refs):
    """refs = (w0, b0, w1, b1, ..., w_out, b_out, o_ref).

    Weights: bf16, BN(eval)+bias pre-folded, zero-padded to 128 lanes.
    Biases:  f32 (1, Dout_pad). slopes_ref: per-hidden-layer PReLU slope in SMEM.
    x_ref:   bf16 activation tile (Bt, Din_pad).
    """
    o_ref = refs[-1]
    wb = refs[:-1]
    n_hidden = len(wb) // 2 - 1

    x = x_ref[...]                                   # (Bt, Din_pad) bf16
    for i in range(n_hidden):
        w = wb[2 * i]
        b = wb[2 * i + 1]
        # MXU: bf16 operands, f32 accumulation; bias + PReLU on the VPU in f32.
        y = jnp.dot(x, w[...], preferred_element_type=jnp.float32) + b[...]
        a = slopes_ref[i]                            # scalar read from SMEM
        x = jnp.where(y >= 0.0, y, a * y).astype(jnp.bfloat16)

    # Final Linear -> lane-dense (Bt, Cpad) f32 output slab.
    o_ref[...] = jnp.dot(x, wb[-2][...], preferred_element_type=jnp.float32) + wb[-1][...]


# ---------------------------------------------------------------------------
# One-time parameter preparation (call once per weight load, NOT per forward).
# ---------------------------------------------------------------------------
def prepare_params(params):
    """Fold BatchNorm1d(eval) + linear bias into the weights, zero-pad every
    feature dim to a multiple of 128, cast weights to bf16 (f32 biases)."""
    weights, biases, slopes = [], [], []
    d_in = params[0]["w"].shape[0]
    cur_in, cur_in_pad = d_in, _round_up(d_in, 128)

    for layer in params[:-1]:
        w, b = layer["w"], layer["b"]
        d_out = w.shape[1]
        d_out_pad = _round_up(d_out, 128)
        scale = layer["gamma"] * jax.lax.rsqrt(layer["running_var"] + _EPS)
        shift = layer["beta"] - layer["running_mean"] * scale
        w_f = w * scale[None, :]                    # fold BN scale into weight columns
        b_f = b * scale + shift                     # fold BN into bias
        w_p = jnp.zeros((cur_in_pad, d_out_pad), jnp.float32).at[:cur_in, :d_out].set(w_f)
        b_p = jnp.zeros((1, d_out_pad), jnp.float32).at[0, :d_out].set(b_f)
        weights.append(w_p.astype(jnp.bfloat16))
        biases.append(b_p)
        slopes.append(jnp.asarray(layer["prelu_a"], jnp.float32).reshape(()))
        cur_in, cur_in_pad = d_out, d_out_pad

    w, b = params[-1]["w"], params[-1]["b"]
    n_classes = w.shape[1]
    d_out_pad = _round_up(n_classes, 128)
    w_p = jnp.zeros((cur_in_pad, d_out_pad), jnp.float32).at[:cur_in, :n_classes].set(w)
    b_p = jnp.zeros((1, d_out_pad), jnp.float32).at[0, :n_classes].set(b)
    weights.append(w_p.astype(jnp.bfloat16))
    biases.append(b_p)

    slopes_arr = jnp.stack(slopes) if slopes else jnp.zeros((1,), jnp.float32)
    return {
        "weights": tuple(weights),
        "biases": tuple(biases),
        "slopes": slopes_arr,
        "n_classes": n_classes,
    }


# ---------------------------------------------------------------------------
# Per-call forward: pad batch, single pallas_call, fused slice.
# ---------------------------------------------------------------------------
@functools.partial(jax.jit, static_argnums=(4,))
def _forward_jit(latents, weights, biases, slopes, n_classes):
    B, d_in = latents.shape
    d_in_pad = weights[0].shape[0]
    d_out_pad = weights[-1].shape[1]

    # Resident VMEM footprint of weights/biases (they stay pinned across the grid).
    resident_bytes = sum(w.size * 2 for w in weights) + sum(b.size * 4 for b in biases)

    # ---- batch tile selection ----
    if B <= 128:
        bt = _round_up(B, 8)                         # single grid step for small batches
        b_pad = bt
    else:
        # Big tiles: at bt=128 the ~0.35 us/step grid overhead dwarfs the per-tile
        # work. Keep >=2 grid steps so v7x's 2 TensorCores both get work, cap by a
        # conservative VMEM budget (v7x has only 64 MiB/TC physical).
        vmem_budget = 48 << 20
        bt = min(1024, max(128, _round_up((B + 1) // 2, 128)))
        while bt > 128 and resident_bytes + 2 * bt * (2 * d_in_pad + 4 * d_out_pad) > vmem_budget:
            bt -= 128
        b_pad = _round_up(B, bt)

    # Stream activations as bf16 (first matmul consumes bf16 anyway) -> halves
    # input HBM->VMEM bytes on the mem-bound path. Zero-padded rows/cols are inert.
    x_p = jnp.zeros((b_pad, d_in_pad), jnp.bfloat16).at[:B, :d_in].set(
        latents.astype(jnp.bfloat16))

    # Weight/bias blocks are resident (index_map always (0,0)); once they are big
    # enough to matter, use a single pipeline buffer instead of the default 2x.
    big_weights = resident_bytes > (2 << 20)
    wb_inputs, wb_specs = [], []
    for w_i, b_i in zip(weights, biases):
        wb_inputs += [w_i, b_i]
        if big_weights:
            wb_specs += [
                pl.BlockSpec(w_i.shape, lambda i: (0, 0), pipeline_mode=pl.Buffered(1)),
                pl.BlockSpec(b_i.shape, lambda i: (0, 0), pipeline_mode=pl.Buffered(1)),
            ]
        else:
            wb_specs += [
                pl.BlockSpec(w_i.shape, lambda i: (0, 0)),
                pl.BlockSpec(b_i.shape, lambda i: (0, 0)),
            ]

    # Explicit VMEM limit: v5e's default scoped limit is only 16 MiB; size it from
    # resident weights + double-buffered activation/output tiles with headroom.
    tile_bytes = 2 * bt * (2 * d_in_pad + 4 * d_out_pad)
    vmem_limit = int(min(64 << 20,
                         max(2 * (resident_bytes + tile_bytes) + (4 << 20), 16 << 20)))

    out_pad = pl.pallas_call(
        _fused_mlp_kernel,
        out_shape=jax.ShapeDtypeStruct((b_pad, d_out_pad), jnp.float32),
        grid=(b_pad // bt,),
        in_specs=[
            pl.BlockSpec(memory_space=pltpu.MemorySpace.SMEM),   # PReLU slopes (scalars)
            pl.BlockSpec((bt, d_in_pad), lambda i: (i, 0)),      # bf16 activation tile
        ] + wb_specs,
        out_specs=pl.BlockSpec((bt, d_out_pad), lambda i: (i, 0)),
        compiler_params=pltpu.CompilerParams(
            dimension_semantics=("parallel",),                   # shards across v7x's 2 TCs
            vmem_limit_bytes=vmem_limit),
    )(slopes, x_p, *wb_inputs)

    # Slice stays inside the jit -> fused with the kernel output, no extra HBM pass.
    return out_pad[:B, :n_classes]


def latent_classifier_forward(latents, prepared):
    return _forward_jit(latents, prepared["weights"], prepared["biases"],
                        prepared["slopes"], prepared["n_classes"])


# ---------------------------------------------------------------------------
# Parameter init (mirrors the PyTorch module's shapes) + references
# ---------------------------------------------------------------------------
def init_params(key, latent_dim, hidden_dims, n_classes):
    params = []
    dims = [latent_dim] + list(hidden_dims)
    for i in range(len(hidden_dims)):
        din, dout = dims[i], dims[i + 1]
        key, k_w, k_b, k_g, k_bt, k_rm, k_rv = jax.random.split(key, 7)
        bound = 1.0 / jnp.sqrt(din)
        params.append({
            # nn.Linear(din, dout): weight (dout, din) -> stored transposed (din, dout)
            "w": jax.random.uniform(k_w, (din, dout), jnp.float32, -bound, bound),
            "b": jax.random.uniform(k_b, (dout,), jnp.float32, -bound, bound),
            # nn.BatchNorm1d(dout) params + running stats (eval mode)
            "gamma": 1.0 + 0.1 * jax.random.normal(k_g, (dout,), jnp.float32),
            "beta": 0.1 * jax.random.normal(k_bt, (dout,), jnp.float32),
            "running_mean": 0.1 * jax.random.normal(k_rm, (dout,), jnp.float32),
            "running_var": 1.0 + 0.1 * jax.random.uniform(k_rv, (dout,), jnp.float32),
            # nn.PReLU(): single slope, PyTorch default init 0.25
            "prelu_a": jnp.array(0.25, jnp.float32),
        })
    din = dims[-1]
    key, k_w, k_b = jax.random.split(key, 3)
    bound = 1.0 / jnp.sqrt(din)
    params.append({
        "w": jax.random.uniform(k_w, (din, n_classes), jnp.float32, -bound, bound),
        "b": jax.random.uniform(k_b, (n_classes,), jnp.float32, -bound, bound),
    })
    return params


def reference_forward_f32(latents, params):
    """Pure f32 reference matching the PyTorch module semantics (eval mode)."""
    x = latents
    for layer in params[:-1]:
        y = x @ layer["w"] + layer["b"]
        y = (y - layer["running_mean"]) * jax.lax.rsqrt(layer["running_var"] + _EPS)
        y = y * layer["gamma"] + layer["beta"]
        x = jnp.where(y >= 0.0, y, layer["prelu_a"] * y)
    return x @ params[-1]["w"] + params[-1]["b"]


def reference_forward_bf16(latents, params):
    """Reference with the same bf16-operand / f32-accumulation matmul semantics."""
    x = latents
    for layer in params[:-1]:
        scale = layer["gamma"] * jax.lax.rsqrt(layer["running_var"] + _EPS)
        shift = layer["beta"] - layer["running_mean"] * scale
        w = (layer["w"] * scale[None, :]).astype(jnp.bfloat16)
        b = layer["b"] * scale + shift
        y = jnp.dot(x.astype(jnp.bfloat16), w, preferred_element_type=jnp.float32) + b
        x = jnp.where(y >= 0.0, y, layer["prelu_a"] * y)
    w = params[-1]["w"].astype(jnp.bfloat16)
    return jnp.dot(x.astype(jnp.bfloat16), w,
                   preferred_element_type=jnp.float32) + params[-1]["b"]


if __name__ == "__main__":
    latent_dim = 128
    hidden_dims = [64, 32]
    n_classes = 10

    key = jax.random.PRNGKey(0)
    key, k_p = jax.random.split(key)
    params = init_params(k_p, latent_dim, hidden_dims, n_classes)
    prepared = prepare_params(params)            # one-time weight prep (not per call)

    # Exercise both the small single-tile path and the B>128 multi-tile grid path.
    for batch in (8, 200):
        key, k_x = jax.random.split(key)
        latents = jax.random.normal(k_x, (batch, latent_dim), jnp.float32)

        out = jax.block_until_ready(latent_classifier_forward(latents, prepared))
        assert out.shape == (batch, n_classes)

        ref_exact = reference_forward_bf16(latents, params)
        ref_f32 = reference_forward_f32(latents, params)
        assert jnp.allclose(out, ref_exact, atol=1e-3, rtol=1e-3), "mismatch vs bf16 reference"
        assert jnp.allclose(out, ref_f32, atol=5e-2, rtol=5e-2), "mismatch vs f32 reference"

    print("KERNEL_OK")
</pallas_src>

<mosaic_0001>
module attributes {stable_mosaic.version = 11 : i64} {
  func.func @_fused_mlp_kernel(%arg0: i32, %arg1: memref<2xf32, #tpu.memory_space<smem>>, %arg2: memref<8x128xbf16, #tpu.memory_space<vmem>>, %arg3: memref<128x128xbf16, #tpu.memory_space<vmem>>, %arg4: memref<1x128xf32, #tpu.memory_space<vmem>>, %arg5: memref<128x128xbf16, #tpu.memory_space<vmem>>, %arg6: memref<1x128xf32, #tpu.memory_space<vmem>>, %arg7: memref<128x128xbf16, #tpu.memory_space<vmem>>, %arg8: memref<1x128xf32, #tpu.memory_space<vmem>>, %arg9: memref<8x128xf32, #tpu.memory_space<vmem>>) attributes {dimension_semantics = [#tpu.dimension_semantics<parallel>], iteration_bounds = array<i64: 1>, scalar_prefetch = 0 : i64, scratch_operands = 0 : i64, tpu.core_type = #tpu.core_type<tc>, window_params = [{transform_indices = @transform_0, window_bounds = array<i64: 2>}, {transform_indices = @transform_1, window_bounds = array<i64: 8, 128>}, {pipeline_mode = #tpu.pipeline_mode<synchronous>, transform_indices = @transform_2, window_bounds = array<i64: 128, 128>}, {pipeline_mode = #tpu.pipeline_mode<synchronous>, transform_indices = @transform_3, window_bounds = array<i64: 1, 128>}, {pipeline_mode = #tpu.pipeline_mode<synchronous>, transform_indices = @transform_4, window_bounds = array<i64: 128, 128>}, {pipeline_mode = #tpu.pipeline_mode<synchronous>, transform_indices = @transform_5, window_bounds = array<i64: 1, 128>}, {pipeline_mode = #tpu.pipeline_mode<synchronous>, transform_indices = @transform_6, window_bounds = array<i64: 128, 128>}, {pipeline_mode = #tpu.pipeline_mode<synchronous>, transform_indices = @transform_7, window_bounds = array<i64: 1, 128>}, {transform_indices = @transform_8, window_bounds = array<i64: 8, 128>}]} {
    %c0 = arith.constant 0 : index
    %c0_0 = arith.constant 0 : index
    %0 = vector.load %arg2[%c0, %c0_0] : memref<8x128xbf16, #tpu.memory_space<vmem>>, vector<8x128xbf16>
    %c0_1 = arith.constant 0 : index
    %c0_2 = arith.constant 0 : index
    %1 = vector.load %arg3[%c0_1, %c0_2] : memref<128x128xbf16, #tpu.memory_space<vmem>>, vector<128x128xbf16>
    %cst = arith.constant dense<0.000000e+00> : vector<8x128xf32>
    %2 = tpu.matmul %0, %1, %cst {dimension_numbers = #tpu.dot_dimension_numbers<[1], [0], [0], [1], [0, 0, 1, 1], [], []>} : vector<8x128xbf16>, vector<128x128xbf16>, vector<8x128xf32> -> vector<8x128xf32>
    %c0_3 = arith.constant 0 : index
    %c0_4 = arith.constant 0 : index
    %3 = vector.load %arg4[%c0_3, %c0_4] : memref<1x128xf32, #tpu.memory_space<vmem>>, vector<1x128xf32>
    %4 = vector.broadcast %3 : vector<1x128xf32> to vector<8x128xf32>
    %5 = arith.addf %2, %4 : vector<8x128xf32>
    %c0_5 = arith.constant 0 : index
    %6 = memref.load %arg1[%c0_5] : memref<2xf32, #tpu.memory_space<smem>>
    %cst_6 = arith.constant 0.000000e+00 : f32
    %7 = vector.broadcast %cst_6 : f32 to vector<8x128xf32>
    %8 = arith.cmpf oge, %5, %7 : vector<8x128xf32>
    %9 = vector.broadcast %6 : f32 to vector<8x128xf32>
    %10 = arith.mulf %9, %5 : vector<8x128xf32>
    %11 = arith.select %8, %5, %10 : vector<8x128xi1>, vector<8x128xf32>
    %12 = arith.truncf %11 : vector<8x128xf32> to vector<8x128xbf16>
    %c0_7 = arith.constant 0 : index
    %c0_8 = arith.constant 0 : index
    %13 = vector.load %arg5[%c0_7, %c0_8] : memref<128x128xbf16, #tpu.memory_space<vmem>>, vector<128x128xbf16>
    %cst_9 = arith.constant dense<0.000000e+00> : vector<8x128xf32>
    %14 = tpu.matmul %12, %13, %cst_9 {dimension_numbers = #tpu.dot_dimension_numbers<[1], [0], [0], [1], [0, 0, 1, 1], [], []>} : vector<8x128xbf16>, vector<128x128xbf16>, vector<8x128xf32> -> vector<8x128xf32>
    %c0_10 = arith.constant 0 : index
    %c0_11 = arith.constant 0 : index
    %15 = vector.load %arg6[%c0_10, %c0_11] : memref<1x128xf32, #tpu.memory_space<vmem>>, vector<1x128xf32>
    %16 = vector.broadcast %15 : vector<1x128xf32> to vector<8x128xf32>
    %17 = arith.addf %14, %16 : vector<8x128xf32>
    %c1 = arith.constant 1 : index
    %18 = memref.load %arg1[%c1] : memref<2xf32, #tpu.memory_space<smem>>
    %cst_12 = arith.constant 0.000000e+00 : f32
    %19 = vector.broadcast %cst_12 : f32 to vector<8x128xf32>
    %20 = arith.cmpf oge, %17, %19 : vector<8x128xf32>
    %21 = vector.broadcast %18 : f32 to vector<8x128xf32>
    %22 = arith.mulf %21, %17 : vector<8x128xf32>
    %23 = arith.select %20, %17, %22 : vector<8x128xi1>, vector<8x128xf32>
    %24 = arith.truncf %23 : vector<8x128xf32> to vector<8x128xbf16>
    %c0_13 = arith.constant 0 : index
    %c0_14 = arith.constant 0 : index
    %25 = vector.load %arg7[%c0_13, %c0_14] : memref<128x128xbf16, #tpu.memory_space<vmem>>, vector<128x128xbf16>
    %cst_15 = arith.constant dense<0.000000e+00> : vector<8x128xf32>
    %26 = tpu.matmul %24, %25, %cst_15 {dimension_numbers = #tpu.dot_dimension_numbers<[1], [0], [0], [1], [0, 0, 1, 1], [], []>} : vector<8x128xbf16>, vector<128x128xbf16>, vector<8x128xf32> -> vector<8x128xf32>
    %c0_16 = arith.constant 0 : index
    %c0_17 = arith.constant 0 : index
    %27 = vector.load %arg8[%c0_16, %c0_17] : memref<1x128xf32, #tpu.memory_space<vmem>>, vector<1x128xf32>
    %28 = vector.broadcast %27 : vector<1x128xf32> to vector<8x128xf32>
    %29 = arith.addf %26, %28 : vector<8x128xf32>
    %c0_18 = arith.constant 0 : index
    %c0_19 = arith.constant 0 : index
    %30 = vector.load %arg9[%c0_18, %c0_19] : memref<8x128xf32, #tpu.memory_space<vmem>>, vector<8x128xf32>
    tpu.vector_store %arg9[%c0_18, %c0_19], %29 {strides = array<i32>} : memref<8x128xf32, #tpu.memory_space<vmem>>, vector<8x128xf32>,
    return
  }
  func.func @transform_0(%arg0: i32) -> i32 {
    %c0_i32 = arith.constant 0 : i32
    %c0_i32_0 = arith.constant 0 : i32
    return %c0_i32 : i32
  }
  func.func @transform_1(%arg0: i32) -> (i32, i32) {
    %c0_i32 = arith.constant 0 : i32
    %c0_i32_0 = arith.constant 0 : i32
    return %arg0, %c0_i32 : i32, i32
  }
  func.func @transform_2(%arg0: i32) -> (i32, i32) {
    %c0_i32 = arith.constant 0 : i32
    %c0_i32_0 = arith.constant 0 : i32
    %c0_i32_1 = arith.constant 0 : i32
    return %c0_i32, %c0_i32_0 : i32, i32
  }
  func.func @transform_3(%arg0: i32) -> (i32, i32) {
    %c0_i32 = arith.constant 0 : i32
    %c0_i32_0 = arith.constant 0 : i32
    %c0_i32_1 = arith.constant 0 : i32
    return %c0_i32, %c0_i32_0 : i32, i32
  }
  func.func @transform_4(%arg0: i32) -> (i32, i32) {
    %c0_i32 = arith.constant 0 : i32
    %c0_i32_0 = arith.constant 0 : i32
    %c0_i32_1 = arith.constant 0 : i32
    return %c0_i32, %c0_i32_0 : i32, i32
  }
  func.func @transform_5(%arg0: i32) -> (i32, i32) {
    %c0_i32 = arith.constant 0 : i32
    %c0_i32_0 = arith.constant 0 : i32
    %c0_i32_1 = arith.constant 0 : i32
    return %c0_i32, %c0_i32_0 : i32, i32
  }
  func.func @transform_6(%arg0: i32) -> (i32, i32) {
    %c0_i32 = arith.constant 0 : i32
    %c0_i32_0 = arith.constant 0 : i32
    %c0_i32_1 = arith.constant 0 : i32
    return %c0_i32, %c0_i32_0 : i32, i32
  }
  func.func @transform_7(%arg0: i32) -> (i32, i32) {
    %c0_i32 = arith.constant 0 : i32
    %c0_i32_0 = arith.constant 0 : i32
    %c0_i32_1 = arith.constant 0 : i32
    return %c0_i32, %c0_i32_0 : i32, i32
  }
  func.func @transform_8(%arg0: i32) -> (i32, i32) {
    %c0_i32 = arith.constant 0 : i32
    %c0_i32_0 = arith.constant 0 : i32
    return %arg0, %c0_i32 : i32, i32
  }
}

</mosaic_0001>

<llo_original>
// kernel: _forward_jit.1
$region0: #{_forward_jit.1}
  #allocation0 [shape = 'u32[]', space=smem, size = 0x4, offset = 0x4, fixed_abs, tag = 'smem constant byte address 0x4 - core index']
  #allocation1 [shape = 'u32[144,128]{1,0:T(1,128)}', space=vmem, size = 0x12000, scoped, tag = 'internal scratch']
  %s0 = inlined_call_operand.vmem [shape: f32[2], index: 0, kind: input, shape index: {}]
  %s1 = inlined_call_operand.vmem [shape: bf16[8,128], index: 1, kind: input, shape index: {}]
  %s2 = inlined_call_operand.hbm [shape: bf16[128,128], index: 2, kind: input, shape index: {}]
  %s3 = inlined_call_operand.vmem [shape: f32[1,128], index: 3, kind: input, shape index: {}]
  %s4 = inlined_call_operand.hbm [shape: bf16[128,128], index: 4, kind: input, shape index: {}]
  %s5 = inlined_call_operand.vmem [shape: f32[1,128], index: 5, kind: input, shape index: {}]
  %s6 = inlined_call_operand.hbm [shape: bf16[128,128], index: 6, kind: input, shape index: {}]
  %s7 = inlined_call_operand.vmem [shape: f32[1,128], index: 7, kind: input, shape index: {}]
  %s8 = inlined_call_operand.hbm [shape: f32[8,128], index: 8, kind: output, shape index: {}]
  %s9 = sld [smem:[#allocation0]]
  $region58: #{_forward_jit.1} parent=0
    _
  %s11 = ssub.s32 1, %s9
  %s12 = scalar_select 0, %s11, %s9
  $region1: #{_forward_jit.1} parent=0
    #allocation2 [shape = 'u8[512]{0}', space=smem, size = 0x200, scoped, tag = 'input window, operand 0, single buffered']
    #allocation3 [shape = 's32[1]{0}', space=sflag, size = 0x4, scoped, tag = 'scoped memory for _forward_jit.1']
    #allocation4 [shape = 's32[1]{0}', space=sflag, size = 0x4, scoped, tag = 'scoped memory for _forward_jit.1']
    #allocation5 [shape = 's32[1]{0}', space=sflag, size = 0x4, scoped, tag = 'scoped memory for _forward_jit.1']
    #allocation6 [shape = 'u8[32768]{0}', space=vmem, size = 0x8000, scoped, tag = 'input window, operand 2, single buffered']
    #allocation7 [shape = 'u8[32768]{0}', space=vmem, size = 0x8000, scoped, tag = 'input window, operand 4, single buffered']
    #allocation8 [shape = 's32[1]{0}', space=sflag, size = 0x4, scoped, tag = 'scoped memory for _forward_jit.1']
    #allocation9 [shape = 'u8[32768]{0}', space=vmem, size = 0x8000, scoped, tag = 'input window, operand 6, single buffered']
    #allocation10 [shape = 'u8[4096]{0}', space=vmem, size = 0x1000, scoped, tag = 'output window, operand 0, single buffered']
    %13 = vsyncpa [#allocation5], 0
    %14 = vsyncpa [#allocation3], 0
    %15 = vsyncpa [#allocation8], 0
    %16 = vsyncpa [#allocation4], 0
    // Predicated region
    $region2: #{_forward_jit.1} parent=1 // pred_check
      _
    $region3: #{_forward_jit.1} parent=1 // pred_check_branch
      %18 = sbr.rel (0) target = $region5
    $region4: #{_forward_jit.1} parent=1 // pred_region
      %s20 = ssub.s32 16, 16
      %21 = vsyncadd [#allocation5], %s20
      %s23 = sshll.u32 %s0, 4
      %s24 = int_to_ptr.vmem [resolvable:$true] %s23
      %26 = dma.vmem_to_smem %s24, 16, [#allocation2], [#allocation5]
    $region5: #{_forward_jit.1} parent=1 // pred_fallthru
      _
    // Predicated region
    $region6: #{_forward_jit.1} parent=1 // pred_check
      _
    $region7: #{_forward_jit.1} parent=1 // pred_check_branch
      %28 = sbr.rel (0) target = $region9
    $region8: #{_forward_jit.1} parent=1 // pred_region
      _
    $region9: #{_forward_jit.1} parent=1 // pred_fallthru
      _
    // Predicated region
    $region10: #{_forward_jit.1} parent=1 // pred_check
      _
    $region11: #{_forward_jit.1} parent=1 // pred_check_branch
      %30 = sbr.rel (0) target = $region13
    $region12: #{_forward_jit.1} parent=1 // pred_region
      %s32 = ssub.s32 1024, 1024
      %33 = vsyncadd [#allocation3], %s32
      %s34 = sshll.u32 [#allocation6], 4
      %s35 = int_to_ptr.vmem [resolvable:$true] %s34
      %40 = dma.hbm_to_vmem [thread:$0]  %s2, 1024, %s35, [#allocation3], 64, 64, 4
    $region13: #{_forward_jit.1} parent=1 // pred_fallthru
      _
    // Predicated region
    $region14: #{_forward_jit.1} parent=1 // pred_check
      _
    $region15: #{_forward_jit.1} parent=1 // pred_check_branch
      %42 = sbr.rel (0) target = $region17
    $region16: #{_forward_jit.1} parent=1 // pred_region
      _
    $region17: #{_forward_jit.1} parent=1 // pred_fallthru
      _
    // Predicated region
    $region18: #{_forward_jit.1} parent=1 // pred_check
      _
    $region19: #{_forward_jit.1} parent=1 // pred_check_branch
      %44 = sbr.rel (0) target = $region21
    $region20: #{_forward_jit.1} parent=1 // pred_region
      %s46 = ssub.s32 1024, 1024
      %47 = vsyncadd [#allocation8], %s46
      %s48 = sshll.u32 [#allocation7], 4
      %s49 = int_to_ptr.vmem [resolvable:$true] %s48
      %54 = dma.hbm_to_vmem [thread:$0]  %s4, 1024, %s49, [#allocation8], 64, 64, 4
    $region21: #{_forward_jit.1} parent=1 // pred_fallthru
      _
    // Predicated region
    $region22: #{_forward_jit.1} parent=1 // pred_check
      _
    $region23: #{_forward_jit.1} parent=1 // pred_check_branch
      %56 = sbr.rel (0) target = $region25
    $region24: #{_forward_jit.1} parent=1 // pred_region
      _
    $region25: #{_forward_jit.1} parent=1 // pred_fallthru
      _
    // Predicated region
    $region26: #{_forward_jit.1} parent=1 // pred_check
      _
    $region27: #{_forward_jit.1} parent=1 // pred_check_branch
      %58 = sbr.rel (0) target = $region29
    $region28: #{_forward_jit.1} parent=1 // pred_region
      %s60 = ssub.s32 1024, 1024
      %61 = vsyncadd [#allocation8], %s60
      %s62 = sshll.u32 [#allocation9], 4
      %s63 = int_to_ptr.vmem [resolvable:$true] %s62
      %68 = dma.hbm_to_vmem [thread:$0]  %s6, 1024, %s63, [#allocation8], 64, 64, 4
    $region29: #{_forward_jit.1} parent=1 // pred_fallthru
      _
    // Predicated region
    $region30: #{_forward_jit.1} parent=1 // pred_check
      _
    $region31: #{_forward_jit.1} parent=1 // pred_check_branch
      %70 = sbr.rel (0) target = $region33
    $region32: #{_forward_jit.1} parent=1 // pred_region
      _
    $region33: #{_forward_jit.1} parent=1 // pred_fallthru
      _
    // Predicated region
    $region34: #{_forward_jit.1} parent=1 // pred_check
      _
    $region35: #{_forward_jit.1} parent=1 // pred_check_branch
      %72 = sbr.rel (0) target = $region37
    $region36: #{_forward_jit.1} parent=1 // pred_region
      %73 = dma.done [#allocation5], 16
    $region37: #{_forward_jit.1} parent=1 // pred_fallthru
      _
    // Predicated region
    $region38: #{_forward_jit.1} parent=1 // pred_check
      _
    $region39: #{_forward_jit.1} parent=1 // pred_check_branch
      %75 = sbr.rel (0) target = $region41
    $region40: #{_forward_jit.1} parent=1 // pred_region
      %76 = dma.done [#allocation3], 1024
    $region41: #{_forward_jit.1} parent=1 // pred_fallthru
      _
    // Predicated region
    $region42: #{_forward_jit.1} parent=1 // pred_check
      _
    $region43: #{_forward_jit.1} parent=1 // pred_check_branch
      %78 = sbr.rel (0) target = $region45
    $region44: #{_forward_jit.1} parent=1 // pred_region
      %79 = dma.done [#allocation8], 1024
    $region45: #{_forward_jit.1} parent=1 // pred_fallthru
      _
    // Predicated region
    $region46: #{_forward_jit.1} parent=1 // pred_check
      _
    $region47: #{_forward_jit.1} parent=1 // pred_check_branch
      %81 = sbr.rel (0) target = $region49
    $region48: #{_forward_jit.1} parent=1 // pred_region
      %82 = dma.done [#allocation8], 1024
    $region49: #{_forward_jit.1} parent=1 // pred_fallthru
      _
    %83 = sfence
    %v85 = vld [vmem:[%s1] sm:$0xf]
    %v86 = vld [vmem:[#allocation6] sm:$0xf]
    %v87 = vld [vmem:[#allocation6 + $0x4] sm:$0xf]
    %v88 = vld [vmem:[#allocation6 + $0x8] sm:$0xf]
    %v89 = vld [vmem:[#allocation6 + $0xc] sm:$0xf]
    %v90 = vld [vmem:[#allocation6 + $0x10] sm:$0xf]
    %v91 = vld [vmem:[#allocation6 + $0x14] sm:$0xf]
    %v92 = vld [vmem:[#allocation6 + $0x18] sm:$0xf]
    %v93 = vld [vmem:[#allocation6 + $0x1c] sm:$0xf]
    %v94 = vld [vmem:[#allocation6 + $0x20] sm:$0xf]
    %v95 = vld [vmem:[#allocation6 + $0x24] sm:$0xf]
    %v96 = vld [vmem:[#allocation6 + $0x28] sm:$0xf]
    %v97 = vld [vmem:[#allocation6 + $0x2c] sm:$0xf]
    %v98 = vld [vmem:[#allocation6 + $0x30] sm:$0xf]
    %v99 = vld [vmem:[#allocation6 + $0x34] sm:$0xf]
    %v100 = vld [vmem:[#allocation6 + $0x38] sm:$0xf]
    %v101 = vld [vmem:[#allocation6 + $0x3c] sm:$0xf]
    %v102 = vld [vmem:[%s3] sm:$0x1]
    %v104 = vlaneseq
    %v105 = vshrl.u32 %v104, 7
    %v106 = vsub.s32 0, %v105
    %v107 = vrot.slane %v102, %v106
    %v125 = vunpack.c.l.b16 %v86
    %v126 = vunpack.c.l.b16 %v87
    %v127 = vunpack.c.l.b16 %v88
    %v128 = vunpack.c.l.b16 %v89
    %v129 = vunpack.c.l.b16 %v90
    %v130 = vunpack.c.l.b16 %v91
    %v131 = vunpack.c.l.b16 %v92
    %v132 = vunpack.c.l.b16 %v93
    %v133 = vunpack.c.l.b16 %v94
    %v134 = vunpack.c.l.b16 %v95
    %v135 = vunpack.c.l.b16 %v96
    %v136 = vunpack.c.l.b16 %v97
    %v137 = vunpack.c.l.b16 %v98
    %v138 = vunpack.c.l.b16 %v99
    %v139 = vunpack.c.l.b16 %v100
    %v140 = vunpack.c.l.b16 %v101
    %v141 = vpack.c.b16 %v126, %v125
    %v142 = vpack.c.b16 %v128, %v127
    %v143 = vpack.c.b16 %v130, %v129
    %v144 = vpack.c.b16 %v132, %v131
    %v145 = vpack.c.b16 %v134, %v133
    %v146 = vpack.c.b16 %v136, %v135
    %v147 = vpack.c.b16 %v138, %v137
    %v148 = vpack.c.b16 %v140, %v139
    %157 = vmatprep.subr.bf16.mxu0 0
    %158 = vmatpush1.bf16.msra.mxu0 %v148
    %159 = vmatprep.subr.bf16.mxu0 0
    %160 = vmatpush1.bf16.msra.mxu0 %v147
    %161 = vmatprep.subr.bf16.mxu0 0
    %162 = vmatpush1.bf16.msra.mxu0 %v146
    %163 = vmatprep.subr.bf16.mxu0 0
    %164 = vmatpush1.bf16.msra.mxu0 %v145
    %165 = vmatprep.subr.bf16.mxu0 0
    %166 = vmatpush1.bf16.msra.mxu0 %v144
    %167 = vmatprep.subr.bf16.mxu0 0
    %168 = vmatpush1.bf16.msra.mxu0 %v143
    %169 = vmatprep.subr.bf16.mxu0 0
    %170 = vmatpush1.bf16.msra.mxu0 %v142
    %171 = vmatprep.subr.bf16.mxu0 0
    %172 = vmatpush1.bf16.msra.mxu0 %v141
    %173 = vmatprep.subr.bf16.mxu0 0
    %174 = vmatpush2.bf16.msra.mxu0 0
    %175 = vmatprep.subr.bf16.mxu0 0
    %176 = vmatpush2.bf16.msra.mxu0 0
    %177 = vmatprep.subr.bf16.mxu0 0
    %178 = vmatpush2.bf16.msra.mxu0 0
    %179 = vmatprep.subr.bf16.mxu0 0
    %180 = vmatpush2.bf16.msra.mxu0 0
    %181 = vmatprep.subr.bf16.mxu0 0
    %182 = vmatpush2.bf16.msra.mxu0 0
    %183 = vmatprep.subr.bf16.mxu0 0
    %184 = vmatpush2.bf16.msra.mxu0 0
    %185 = vmatprep.subr.bf16.mxu0 0
    %186 = vmatpush2.bf16.msra.mxu0 0
    %187 = vmatprep.subr.bf16.mxu0 0
    %188 = vmatpush2.bf16.msra.mxu0 0
    %189 = vmatprep.mubr.bf16.mxu0 0
    %190 = vmatmul.mubr.bf16.gmra.mxu0 %v85
    %v191 = vpop.f32.mrf.mxu0
    %v192 = vadd.f32 %v107, %v191
    %v193 = vpop.f32.mrf.mxu0
    %v194 = vpop.f32.mrf.mxu0
    %v195 = vpop.f32.mrf.mxu0
    %196 = vdwg.mxu0
    %s197 = sld [smem:[#allocation2]]
    %vm198 = vcmp.ge.f32.partialorder %v192, 0.0
    %v199 = vstv %s197
    %v200 = vmul.f32 %v199, %v192
    %v201 = vsel %vm198, %v192, %v200
    %v202 = vpack.c.bf16 %v201, %v201
    %v203 = vld [vmem:[#allocation7] sm:$0xf]
    %v204 = vld [vmem:[#allocation7 + $0x4] sm:$0xf]
    %v205 = vld [vmem:[#allocation7 + $0x8] sm:$0xf]
    %v206 = vld [vmem:[#allocation7 + $0xc] sm:$0xf]
    %v207 = vld [vmem:[#allocation7 + $0x10] sm:$0xf]
    %v208 = vld [vmem:[#allocation7 + $0x14] sm:$0xf]
    %v209 = vld [vmem:[#allocation7 + $0x18] sm:$0xf]
    %v210 = vld [vmem:[#allocation7 + $0x1c] sm:$0xf]
    %v211 = vld [vmem:[#allocation7 + $0x20] sm:$0xf]
    %v212 = vld [vmem:[#allocation7 + $0x24] sm:$0xf]
    %v213 = vld [vmem:[#allocation7 + $0x28] sm:$0xf]
    %v214 = vld [vmem:[#allocation7 + $0x2c] sm:$0xf]
    %v215 = vld [vmem:[#allocation7 + $0x30] sm:$0xf]
    %v216 = vld [vmem:[#allocation7 + $0x34] sm:$0xf]
    %v217 = vld [vmem:[#allocation7 + $0x38] sm:$0xf]
    %v218 = vld [vmem:[#allocation7 + $0x3c] sm:$0xf]
    %v219 = vld [vmem:[%s5] sm:$0x1]
    %v221 = vlaneseq
    %v222 = vshrl.u32 %v221, 7
    %v223 = vsub.s32 0, %v222
    %v224 = vrot.slane %v219, %v223
    %v242 = vunpack.c.l.b16 %v203
    %v243 = vunpack.c.l.b16 %v204
    %v244 = vunpack.c.l.b16 %v205
    %v245 = vunpack.c.l.b16 %v206
    %v246 = vunpack.c.l.b16 %v207
    %v247 = vunpack.c.l.b16 %v208
    %v248 = vunpack.c.l.b16 %v209
    %v249 = vunpack.c.l.b16 %v210
    %v250 = vunpack.c.l.b16 %v211
    %v251 = vunpack.c.l.b16 %v212
    %v252 = vunpack.c.l.b16 %v213
    %v253 = vunpack.c.l.b16 %v214
    %v254 = vunpack.c.l.b16 %v215
    %v255 = vunpack.c.l.b16 %v216
    %v256 = vunpack.c.l.b16 %v217
    %v257 = vunpack.c.l.b16 %v218
    %v258 = vpack.c.b16 %v243, %v242
    %v259 = vpack.c.b16 %v245, %v244
    %v260 = vpack.c.b16 %v247, %v246
    %v261 = vpack.c.b16 %v249, %v248
    %v262 = vpack.c.b16 %v251, %v250
    %v263 = vpack.c.b16 %v253, %v252
    %v264 = vpack.c.b16 %v255, %v254
    %v265 = vpack.c.b16 %v257, %v256
    %274 = vmatprep.subr.bf16.mxu0 0
    %275 = vmatpush1.bf16.msra.mxu0 %v265
    %276 = vmatprep.subr.bf16.mxu0 0
    %277 = vmatpush1.bf16.msra.mxu0 %v264
    %278 = vmatprep.subr.bf16.mxu0 0
    %279 = vmatpush1.bf16.msra.mxu0 %v263
    %280 = vmatprep.subr.bf16.mxu0 0
    %281 = vmatpush1.bf16.msra.mxu0 %v262
    %282 = vmatprep.subr.bf16.mxu0 0
    %283 = vmatpush1.bf16.msra.mxu0 %v261
    %284 = vmatprep.subr.bf16.mxu0 0
    %285 = vmatpush1.bf16.msra.mxu0 %v260
    %286 = vmatprep.subr.bf16.mxu0 0
    %287 = vmatpush1.bf16.msra.mxu0 %v259
    %288 = vmatprep.subr.bf16.mxu0 0
    %289 = vmatpush1.bf16.msra.mxu0 %v258
    %290 = vmatprep.subr.bf16.mxu0 0
    %291 = vmatpush2.bf16.msra.mxu0 0
    %292 = vmatprep.subr.bf16.mxu0 0
    %293 = vmatpush2.bf16.msra.mxu0 0
    %294 = vmatprep.subr.bf16.mxu0 0
    %295 = vmatpush2.bf16.msra.mxu0 0
    %296 = vmatprep.subr.bf16.mxu0 0
    %297 = vmatpush2.bf16.msra.mxu0 0
    %298 = vmatprep.subr.bf16.mxu0 0
    %299 = vmatpush2.bf16.msra.mxu0 0
    %300 = vmatprep.subr.bf16.mxu0 0
    %301 = vmatpush2.bf16.msra.mxu0 0
    %302 = vmatprep.subr.bf16.mxu0 0
    %303 = vmatpush2.bf16.msra.mxu0 0
    %304 = vmatprep.subr.bf16.mxu0 0
    %305 = vmatpush2.bf16.msra.mxu0 0
    %306 = vmatprep.mubr.bf16.mxu0 0
    %307 = vmatmul.mubr.bf16.gmra.mxu0 %v202
    %v308 = vpop.f32.mrf.mxu0
    %v309 = vadd.f32 %v224, %v308
    %v310 = vpop.f32.mrf.mxu0
    %v311 = vpop.f32.mrf.mxu0
    %v312 = vpop.f32.mrf.mxu0
    %313 = vdwg.mxu0
    %s314 = sld [smem:[#allocation2 + $0x1]]
    %vm315 = vcmp.ge.f32.partialorder %v309, 0.0
    %v316 = vstv %s314
    %v317 = vmul.f32 %v316, %v309
    %v318 = vsel %vm315, %v309, %v317
    %v319 = vpack.c.bf16 %v318, %v318
    %v320 = vld [vmem:[#allocation9] sm:$0xf]
    %v321 = vld [vmem:[#allocation9 + $0x4] sm:$0xf]
    %v322 = vld [vmem:[#allocation9 + $0x8] sm:$0xf]
    %v323 = vld [vmem:[#allocation9 + $0xc] sm:$0xf]
    %v324 = vld [vmem:[#allocation9 + $0x10] sm:$0xf]
    %v325 = vld [vmem:[#allocation9 + $0x14] sm:$0xf]
    %v326 = vld [vmem:[#allocation9 + $0x18] sm:$0xf]
    %v327 = vld [vmem:[#allocation9 + $0x1c] sm:$0xf]
    %v328 = vld [vmem:[#allocation9 + $0x20] sm:$0xf]
    %v329 = vld [vmem:[#allocation9 + $0x24] sm:$0xf]
    %v330 = vld [vmem:[#allocation9 + $0x28] sm:$0xf]
    %v331 = vld [vmem:[#allocation9 + $0x2c] sm:$0xf]
    %v332 = vld [vmem:[#allocation9 + $0x30] sm:$0xf]
    %v333 = vld [vmem:[#allocation9 + $0x34] sm:$0xf]
    %v334 = vld [vmem:[#allocation9 + $0x38] sm:$0xf]
    %v335 = vld [vmem:[#allocation9 + $0x3c] sm:$0xf]
    %v336 = vld [vmem:[%s7] sm:$0x1]
    %v338 = vlaneseq
    %v339 = vshrl.u32 %v338, 7
    %v340 = vsub.s32 0, %v339
    %v341 = vrot.slane %v336, %v340
    %v359 = vunpack.c.l.b16 %v320
    %v360 = vunpack.c.l.b16 %v321
    %v361 = vunpack.c.l.b16 %v322
    %v362 = vunpack.c.l.b16 %v323
    %v363 = vunpack.c.l.b16 %v324
    %v364 = vunpack.c.l.b16 %v325
    %v365 = vunpack.c.l.b16 %v326
    %v366 = vunpack.c.l.b16 %v327
    %v367 = vunpack.c.l.b16 %v328
    %v368 = vunpack.c.l.b16 %v329
    %v369 = vunpack.c.l.b16 %v330
    %v370 = vunpack.c.l.b16 %v331
    %v371 = vunpack.c.l.b16 %v332
    %v372 = vunpack.c.l.b16 %v333
    %v373 = vunpack.c.l.b16 %v334
    %v374 = vunpack.c.l.b16 %v335
    %v375 = vpack.c.b16 %v360, %v359
    %v376 = vpack.c.b16 %v362, %v361
    %v377 = vpack.c.b16 %v364, %v363
    %v378 = vpack.c.b16 %v366, %v365
    %v379 = vpack.c.b16 %v368, %v367
    %v380 = vpack.c.b16 %v370, %v369
    %v381 = vpack.c.b16 %v372, %v371
    %v382 = vpack.c.b16 %v374, %v373
    %391 = vmatprep.subr.bf16.mxu0 0
    %392 = vmatpush1.bf16.msra.mxu0 %v382
    %393 = vmatprep.subr.bf16.mxu0 0
    %394 = vmatpush1.bf16.msra.mxu0 %v381
    %395 = vmatprep.subr.bf16.mxu0 0
    %396 = vmatpush1.bf16.msra.mxu0 %v380
    %397 = vmatprep.subr.bf16.mxu0 0
    %398 = vmatpush1.bf16.msra.mxu0 %v379
    %399 = vmatprep.subr.bf16.mxu0 0
    %400 = vmatpush1.bf16.msra.mxu0 %v378
    %401 = vmatprep.subr.bf16.mxu0 0
    %402 = vmatpush1.bf16.msra.mxu0 %v377
    %403 = vmatprep.subr.bf16.mxu0 0
    %404 = vmatpush1.bf16.msra.mxu0 %v376
    %405 = vmatprep.subr.bf16.mxu0 0
    %406 = vmatpush1.bf16.msra.mxu0 %v375
    %407 = vmatprep.subr.bf16.mxu0 0
    %408 = vmatpush2.bf16.msra.mxu0 0
    %409 = vmatprep.subr.bf16.mxu0 0
    %410 = vmatpush2.bf16.msra.mxu0 0
    %411 = vmatprep.subr.bf16.mxu0 0
    %412 = vmatpush2.bf16.msra.mxu0 0
    %413 = vmatprep.subr.bf16.mxu0 0
    %414 = vmatpush2.bf16.msra.mxu0 0
    %415 = vmatprep.subr.bf16.mxu0 0
    %416 = vmatpush2.bf16.msra.mxu0 0
    %417 = vmatprep.subr.bf16.mxu0 0
    %418 = vmatpush2.bf16.msra.mxu0 0
    %419 = vmatprep.subr.bf16.mxu0 0
    %420 = vmatpush2.bf16.msra.mxu0 0
    %421 = vmatprep.subr.bf16.mxu0 0
    %422 = vmatpush2.bf16.msra.mxu0 0
    %423 = vmatprep.mubr.bf16.mxu0 0
    %424 = vmatmul.mubr.bf16.gmra.mxu0 %v319
    %v425 = vpop.f32.mrf.mxu0
    %v426 = vadd.f32 %v341, %v425
    %v427 = vpop.f32.mrf.mxu0
    %v428 = vpop.f32.mrf.mxu0
    %v429 = vpop.f32.mrf.mxu0
    %430 = vdwg.mxu0
    %431 = vst [vmem:[#allocation10] sm:$0xff] %v426
    // Predicated region
    $region50: #{_forward_jit.1} parent=1 // pred_check
      _
    $region51: #{_forward_jit.1} parent=1 // pred_check_branch
      %433 = sbr.rel (0) target = $region53
    $region52: #{_forward_jit.1} parent=1 // pred_region
      %s435 = ssub.s32 128, 128
      %436 = vsyncadd [#allocation4], %s435
      %s438 = sshll.u32 [#allocation10], 4
      %s439 = int_to_ptr.vmem [resolvable:$true] %s438
      %441 = dma.vmem_to_hbm [thread:$0]  %s439, 128, %s8, [#allocation4]
    $region53: #{_forward_jit.1} parent=1 // pred_fallthru
      _
    // Predicated region
    $region54: #{_forward_jit.1} parent=1 // pred_check
      _
    $region55: #{_forward_jit.1} parent=1 // pred_check_branch
      %443 = sbr.rel (0) target = $region57
    $region56: #{_forward_jit.1} parent=1 // pred_region
      %444 = dma.done [#allocation4], 128
    $region57: #{_forward_jit.1} parent=1 // pred_fallthru
      _
    %445 = vsyncpa [#allocation3], 1
    %446 = vsyncpa [#allocation8], 1
    %447 = vsyncpa [#allocation4], 1
    %448 = vsyncpa [#allocation5], 1

</llo_original>
